<compile_context>
chip_gen: v7x
topology: tpu7x:2x2x1
jax: 0.10.0
libtpu: 0.0.40
codegen_flags: <defaults>
</compile_context>

<pallas_src>
import functools
import numpy as np
import jax
import jax.numpy as jnp
from jax.experimental import pallas as pl
from jax.experimental.pallas import tpu as pltpu

_EPS = 1e-5            # torch LayerNorm default
_BLOCK_M = 2048        # row tile (2048x128 bf16 = 512 KiB -> comfortably in VMEM, fewer steps)


def _round_up(x, m):
    return (x + m - 1) // m * m


def _cparams(n_axes=1):
    return pltpu.CompilerParams(
        dimension_semantics=("parallel",) * n_axes,
        vmem_limit_bytes=32 * 1024 * 1024)


def _pick_bm(n, block_m=_BLOCK_M):
    """Row tile: as big as possible, but >=2 grid steps (v7x has 2 TensorCores)."""
    if n <= 8:
        return 8
    half = _round_up((n + 1) // 2, 8)
    return int(min(block_m, half))


# ----------------------------------------------------------------------------
# Pallas kernels
# ----------------------------------------------------------------------------
def _linear_kernel(x_ref, w_ref, b_ref, o_ref, *, activation):
    y = jnp.dot(x_ref[...], w_ref[...], preferred_element_type=jnp.float32)
    y = y + b_ref[...]
    if activation == "relu":
        y = jnp.maximum(y, 0.0)
    o_ref[...] = y.astype(o_ref.dtype)


def _linear2_kernel(a_ref, c_ref, w_ref, b_ref, o_ref, *, activation):
    # fused: act((a + c) @ W + b)  -- avoids materializing (a + c) in HBM
    s = a_ref[...] + c_ref[...]
    y = jnp.dot(s, w_ref[...], preferred_element_type=jnp.float32) + b_ref[...]
    if activation == "relu":
        y = jnp.maximum(y, 0.0)
    o_ref[...] = y.astype(o_ref.dtype)


def _gnn_update_kernel(agg_ref, x_ref, w_ref, b_ref, g_ref, beta_ref, o_ref, *, eps):
    # fused: LayerNorm(x + relu(agg @ W + b))
    upd = jnp.dot(agg_ref[...], w_ref[...], preferred_element_type=jnp.float32)
    upd = jnp.maximum(upd + b_ref[...], 0.0)
    y = x_ref[...].astype(jnp.float32) + upd
    mu = jnp.mean(y, axis=-1, keepdims=True)
    var = jnp.mean(jnp.square(y - mu), axis=-1, keepdims=True)
    yn = (y - mu) * jax.lax.rsqrt(var + eps)
    o_ref[...] = (yn * g_ref[...] + beta_ref[...]).astype(o_ref.dtype)


def _merge_kernel(a_ref, c_ref, w_ref, b_ref, o_ref):
    # fused concat: relu([a | c] @ W + b) with ONE K=2D matmul (fills 256-deep MXU).
    s = jnp.concatenate([a_ref[...], c_ref[...]], axis=-1)          # (bm, 2D) bf16
    y = jnp.dot(s, w_ref[...], preferred_element_type=jnp.float32) + b_ref[...]
    o_ref[...] = jnp.maximum(y, 0.0).astype(o_ref.dtype)


def _fused_head_kernel(x_ref, w1_ref, b1_ref, w2_ref, b2_ref, o_ref):
    # one grid step per head-set: ffnn(relu(pool_linear(mean_pooled_x)))
    h = jnp.dot(x_ref[0], w1_ref[0], preferred_element_type=jnp.float32) + b1_ref[0]
    h = jnp.maximum(h, 0.0).astype(jnp.bfloat16)
    y = jnp.dot(h, w2_ref[0], preferred_element_type=jnp.float32) + b2_ref[0]
    o_ref[0] = y.astype(o_ref.dtype)


def _mha_kernel(x_ref, mask_ref, pe_ref, g_ref, beta_ref,
                wqkv_ref, bqkv_ref, wo_ref, bo_ref, o_ref, *, heads, eps):
    gb, L, D = x_ref.shape
    hd = D // heads
    # --- fused (x + positional encoding) -> LayerNorm -----------------------
    x = x_ref[...].astype(jnp.float32) + pe_ref[...][None, :, :]
    mu = jnp.mean(x, axis=-1, keepdims=True)
    var = jnp.mean(jnp.square(x - mu), axis=-1, keepdims=True)
    xn = (x - mu) * jax.lax.rsqrt(var + eps) * g_ref[...] + beta_ref[...]
    # --- single fused QKV projection (1/sqrt(hd) folded into Wq), bf16 asap ---
    xn2 = xn.reshape(gb * L, D).astype(jnp.bfloat16)
    qkv = (jnp.dot(xn2, wqkv_ref[...], preferred_element_type=jnp.float32)
           + bqkv_ref[...]).astype(jnp.bfloat16)                 # bf16: halve live-value size
    qkv = qkv.reshape(gb, L, 3 * D)
    m = mask_ref[...]                                            # (gb, 1, L) additive key mask
    # --- per-head attention (graph-batched); contexts concatenated in-register,
    #     no f32 VMEM scratch, no masked partial-lane stores ---------------------
    ctx_heads = []
    for h in range(heads):                                       # static unroll
        qh = qkv[:, :, h * hd:(h + 1) * hd]
        kh = qkv[:, :, D + h * hd:D + (h + 1) * hd]
        vh = qkv[:, :, 2 * D + h * hd:2 * D + (h + 1) * hd]
        s = jnp.einsum("gld,gmd->glm", qh, kh, preferred_element_type=jnp.float32)
        s = s + m
        s = s - jnp.max(s, axis=-1, keepdims=True)
        p = jnp.exp(s)
        p = p * pl.reciprocal(jnp.sum(p, axis=-1, keepdims=True), approx=True)
        ch = jnp.einsum("glm,gmd->gld", p.astype(jnp.bfloat16), vh,
                        preferred_element_type=jnp.float32)
        ctx_heads.append(ch.astype(jnp.bfloat16))
    ctx = jnp.concatenate(ctx_heads, axis=-1).reshape(gb * L, D)  # (gb*L, D) bf16
    # --- output projection ----------------------------------------------------
    out = jnp.dot(ctx, wo_ref[...], preferred_element_type=jnp.float32) + bo_ref[...]
    o_ref[...] = out.reshape(gb, L, D).astype(o_ref.dtype)


# ----------------------------------------------------------------------------
# Pallas wrappers (row-tiled, bf16 activations)
# ----------------------------------------------------------------------------
def linear(x, w, b, activation="none", out_dtype=jnp.bfloat16, block_m=_BLOCK_M):
    n, din = x.shape
    dout = w.shape[1]
    bm = _pick_bm(n, block_m)
    cost = pl.CostEstimate(
        flops=2 * n * din * dout, transcendentals=0,
        bytes_accessed=2 * (n * din + din * dout + n * dout) + 4 * dout)
    return pl.pallas_call(
        functools.partial(_linear_kernel, activation=activation),
        grid=(pl.cdiv(n, bm),),
        in_specs=[
            pl.BlockSpec((bm, din), lambda i: (i, 0)),
            pl.BlockSpec((din, dout), lambda i: (0, 0)),
            pl.BlockSpec((1, dout), lambda i: (0, 0)),
        ],
        out_specs=pl.BlockSpec((bm, dout), lambda i: (i, 0)),
        out_shape=jax.ShapeDtypeStruct((n, dout), out_dtype),
        compiler_params=_cparams(),
        cost_estimate=cost,
    )(x.astype(jnp.bfloat16), w.astype(jnp.bfloat16), b.astype(jnp.float32))


def linear2(a, c, w, b, activation="relu", block_m=_BLOCK_M):
    n, din = a.shape
    dout = w.shape[1]
    bm = _pick_bm(n, block_m)
    return pl.pallas_call(
        functools.partial(_linear2_kernel, activation=activation),
        grid=(pl.cdiv(n, bm),),
        in_specs=[
            pl.BlockSpec((bm, din), lambda i: (i, 0)),
            pl.BlockSpec((bm, din), lambda i: (i, 0)),
            pl.BlockSpec((din, dout), lambda i: (0, 0)),
            pl.BlockSpec((1, dout), lambda i: (0, 0)),
        ],
        out_specs=pl.BlockSpec((bm, dout), lambda i: (i, 0)),
        out_shape=jax.ShapeDtypeStruct((n, dout), jnp.bfloat16),
        compiler_params=_cparams(),
    )(a.astype(jnp.bfloat16), c.astype(jnp.bfloat16),
      w.astype(jnp.bfloat16), b.astype(jnp.float32))


def gnn_update(agg, x, p, block_m=_BLOCK_M):
    n, d = x.shape
    bm = _pick_bm(n, block_m)
    return pl.pallas_call(
        functools.partial(_gnn_update_kernel, eps=_EPS),
        grid=(pl.cdiv(n, bm),),
        in_specs=[
            pl.BlockSpec((bm, d), lambda i: (i, 0)),
            pl.BlockSpec((bm, d), lambda i: (i, 0)),
            pl.BlockSpec((d, d), lambda i: (0, 0)),
            pl.BlockSpec((1, d), lambda i: (0, 0)),
            pl.BlockSpec((1, d), lambda i: (0, 0)),
            pl.BlockSpec((1, d), lambda i: (0, 0)),
        ],
        out_specs=pl.BlockSpec((bm, d), lambda i: (i, 0)),
        out_shape=jax.ShapeDtypeStruct((n, d), jnp.bfloat16),
        compiler_params=_cparams(),
    )(agg.astype(jnp.bfloat16), x.astype(jnp.bfloat16),
      p["w_upd"], p["b_upd"], p["ln_g"], p["ln_b"])


def merge(a, c, p, block_m=_BLOCK_M):
    # TODO(synk): merge internals not given; interpreted as Linear(concat(a,c)) + ReLU
    # (dropout eval-mode); concat done in-VMEM and fed to one K=2D matmul.
    n, d = a.shape
    dout = p["w"].shape[1]
    bm = _pick_bm(n, block_m)
    return pl.pallas_call(
        _merge_kernel,
        grid=(pl.cdiv(n, bm),),
        in_specs=[
            pl.BlockSpec((bm, d), lambda i: (i, 0)),
            pl.BlockSpec((bm, d), lambda i: (i, 0)),
            pl.BlockSpec((2 * d, dout), lambda i: (0, 0)),
            pl.BlockSpec((1, dout), lambda i: (0, 0)),
        ],
        out_specs=pl.BlockSpec((bm, dout), lambda i: (i, 0)),
        out_shape=jax.ShapeDtypeStruct((n, dout), jnp.bfloat16),
        compiler_params=_cparams(),
    )(a.astype(jnp.bfloat16), c.astype(jnp.bfloat16), p["w"], p["b"])


def pooled_heads(feats, batch_vec, num_graphs, pool_ps, ffnn_ps):
    """Three graph_pool+Linear heads fused into ONE pallas_call (grid=(3,))."""
    # TODO(synk): graph_pool internals not given; per-graph mean pool -> Linear+ReLU,
    # fused here with the following Linear head.
    means = [_segment_mean(f, batch_vec, num_graphs) for f in feats]     # (g, D) each
    g, d = means[0].shape
    g_pad = _round_up(g, 8)
    mean_stack = jnp.stack(
        [jnp.pad(m, ((0, g_pad - g), (0, 0))) for m in means])           # (3, g_pad, D)
    w1 = jnp.stack([p["w"] for p in pool_ps])                            # (3, D, D)
    b1 = jnp.stack([p["b"] for p in pool_ps])                            # (3, 1, D)
    w2 = jnp.stack([p["w"] for p in ffnn_ps])                            # (3, D, lbl)
    b2 = jnp.stack([p["b"] for p in ffnn_ps])                            # (3, 1, lbl)
    lbl = w2.shape[-1]
    out = pl.pallas_call(
        _fused_head_kernel,
        grid=(3,),
        in_specs=[
            pl.BlockSpec((1, g_pad, d), lambda i: (i, 0, 0)),
            pl.BlockSpec((1, d, d), lambda i: (i, 0, 0)),
            pl.BlockSpec((1, 1, d), lambda i: (i, 0, 0)),
            pl.BlockSpec((1, d, lbl), lambda i: (i, 0, 0)),
            pl.BlockSpec((1, 1, lbl), lambda i: (i, 0, 0)),
        ],
        out_specs=pl.BlockSpec((1, g_pad, lbl), lambda i: (i, 0, 0)),
        out_shape=jax.ShapeDtypeStruct((3, g_pad, lbl), jnp.float32),
        compiler_params=_cparams(),
    )(mean_stack, w1, b1, w2, b2)
    return out[0, :g], out[1, :g], out[2, :g]


def _pick_gb(G, L, D, heads, budget_bytes=8 * 1024 * 1024):
    """VMEM-aware graphs-per-step (v7x has only 64 MiB VMEM / 32 MiB scoped default)."""
    per_graph = (L * 3 * D * 2                # qkv bf16
                 + heads * L * L * (4 + 2)    # scores f32 + probs bf16 (per head)
                 + 3 * L * D * 4              # LayerNorm / f32 temps
                 + 4 * L * D * 2)             # x/out blocks, double-buffered, bf16
    gb = max(1, min(G, budget_bytes // max(per_graph, 1)))
    if G >= 2:
        gb = min(gb, (G + 1) // 2)            # >=2 grid steps -> feed both v7x TensorCores
    return int(gb)


def mha_attention(x, att_mask, pe, norm_p, att_p, heads):
    """PE-add + LayerNorm + multi-head self-attention; several graphs per grid step."""
    G, L, D = x.shape
    assert D % heads == 0
    gb = _pick_gb(G, L, D, heads)
    G_pad = _round_up(G, gb)
    if G_pad != G:                      # explicit zero padding: no undefined reads / NaNs
        x = jnp.pad(x, ((0, G_pad - G), (0, 0), (0, 0)))
        att_mask = jnp.pad(att_mask, ((0, G_pad - G), (0, 0)))
    mask3 = att_mask.reshape(G_pad, 1, L).astype(jnp.float32)
    out = pl.pallas_call(
        functools.partial(_mha_kernel, heads=heads, eps=_EPS),
        grid=(pl.cdiv(G_pad, gb),),
        in_specs=[
            pl.BlockSpec((gb, L, D), lambda g: (g, 0, 0)),
            pl.BlockSpec((gb, 1, L), lambda g: (g, 0, 0)),
            pl.BlockSpec((L, D), lambda g: (0, 0)),
            pl.BlockSpec((1, D), lambda g: (0, 0)),
            pl.BlockSpec((1, D), lambda g: (0, 0)),
            pl.BlockSpec((D, 3 * D), lambda g: (0, 0)),
            pl.BlockSpec((1, 3 * D), lambda g: (0, 0)),
            pl.BlockSpec((D, D), lambda g: (0, 0)),
            pl.BlockSpec((1, D), lambda g: (0, 0)),
        ],
        out_specs=pl.BlockSpec((gb, L, D), lambda g: (g, 0, 0)),
        out_shape=jax.ShapeDtypeStruct((G_pad, L, D), jnp.bfloat16),
        compiler_params=_cparams(),
    )(x.astype(jnp.bfloat16), mask3, pe.astype(jnp.float32),
      norm_p["g"].reshape(1, D).astype(jnp.float32),
      norm_p["b"].reshape(1, D).astype(jnp.float32),
      att_p["wqkv"], att_p["bqkv"], att_p["wo"], att_p["bo"])
    return out[:G]


# ----------------------------------------------------------------------------
# Module pieces (Pallas compute + JAX gather/scatter glue)
# ----------------------------------------------------------------------------
def _segment_mean(x, seg, num_segments):
    s = jax.ops.segment_sum(x.astype(jnp.float32), seg, num_segments=num_segments)
    c = jax.ops.segment_sum(jnp.ones((x.shape[0],), jnp.float32), seg,
                            num_segments=num_segments)
    return (s / jnp.maximum(c, 1.0)[:, None]).astype(jnp.bfloat16)


def gnn_block(x, edge_index, edge_feat, p):
    # TODO(synk): gnn_block internals not given; message-passing with (src + edge_feat)
    # messages, f32 sum aggregation, relu update, residual LayerNorm (gather stays in XLA;
    # add+linear and linear+residual+LN are fused Pallas kernels).
    src, dst = edge_index[0], edge_index[1]
    msg = linear2(x[src], edge_feat, p["w_msg"], p["b_msg"], activation="relu")
    agg = jax.ops.segment_sum(msg.astype(jnp.float32), dst, num_segments=x.shape[0])
    return gnn_update(agg, x, p)


def edge_graph_pool(edge_x, edge_index, p, num_nodes):
    # TODO(synk): edge_graph_pool internals not given; scatter-mean of edge features
    # onto destination nodes followed by Linear+ReLU.
    mean = _segment_mean(edge_x, edge_index[1], num_nodes)
    return linear(mean, p["w"], p["b"], activation="relu")


def graph_to_seq(batch_vec, graph_z, num_graphs, max_nodes):
    n, d = graph_z.shape
    starts = jnp.searchsorted(batch_vec, jnp.arange(num_graphs))
    pos = jnp.arange(n) - starts[batch_vec]
    x = jnp.zeros((num_graphs, max_nodes, d), graph_z.dtype)
    x = x.at[batch_vec, pos].set(graph_z)
    valid = jnp.zeros((num_graphs, max_nodes), bool).at[batch_vec, pos].set(True)
    att_mask = jnp.where(valid, 0.0, -1e9).astype(jnp.float32)
    return x, (batch_vec, pos), att_mask


def position_encoding(max_nodes, d):
    pos = np.arange(max_nodes)[:, None].astype(np.float32)
    i = np.arange(d)[None, :].astype(np.float32)
    angle = pos / np.power(10000.0, (2.0 * np.floor(i / 2.0)) / d)
    pe = np.where(np.arange(d)[None, :] % 2 == 0, np.sin(angle), np.cos(angle))
    return jnp.asarray(pe, jnp.float32)


# ----------------------------------------------------------------------------
# Parameters (weights bf16 for the MXU, biases / LN params f32)
# ----------------------------------------------------------------------------
def _lin_params(key, din, dout):
    w = jax.random.normal(key, (din, dout), jnp.float32) / np.sqrt(din)
    return {"w": w.astype(jnp.bfloat16), "b": jnp.zeros((1, dout), jnp.float32)}


def init_params(key, node_size, edge_size, layer_size, label_size, layer_depth, heads):
    keys = iter(jax.random.split(key, 128))
    D = layer_size
    params = {
        "atom_init": _lin_params(next(keys), node_size, D),
        "bond_init": _lin_params(next(keys), node_size + edge_size, D),
        "atom_blocks": [],
        "bond_blocks": [],
    }
    for _ in range(layer_depth):
        for name in ("atom_blocks", "bond_blocks"):
            pm = _lin_params(next(keys), D, D)
            pu = _lin_params(next(keys), D, D)
            params[name].append({
                "w_msg": pm["w"], "b_msg": pm["b"],
                "w_upd": pu["w"], "b_upd": pu["b"],
                "ln_g": jnp.ones((1, D), jnp.float32),
                "ln_b": jnp.zeros((1, D), jnp.float32),
            })
    params["pooling_edge"] = _lin_params(next(keys), D, D)

    def _merge_params(k):
        # single stacked (2D, D) weight -> one K=2D matmul in the merge kernel
        lp = _lin_params(k, 2 * D, D)
        return {"w": lp["w"], "b": lp["b"]}

    params["merge1"] = _merge_params(next(keys))
    params["norm"] = {"g": jnp.ones((D,), jnp.float32), "b": jnp.zeros((D,), jnp.float32)}

    # fused QKV attention weights; 1/sqrt(head_dim) folded into Wq (biases are zero).
    scale = 1.0 / np.sqrt(D // heads)
    ws = [jax.random.normal(next(keys), (D, D), jnp.float32) / np.sqrt(D) for _ in range(4)]
    params["attention"] = {
        "wqkv": jnp.concatenate([ws[0] * scale, ws[1], ws[2]], axis=1).astype(jnp.bfloat16),
        "bqkv": jnp.zeros((1, 3 * D), jnp.float32),
        "wo": ws[3].astype(jnp.bfloat16),
        "bo": jnp.zeros((1, D), jnp.float32),
    }
    params["merge2"] = _merge_params(next(keys))
    params["pooling_graph"] = _lin_params(next(keys), D, D)
    params["ffnn"] = _lin_params(next(keys), D, label_size)
    params["pooling_z1"] = _lin_params(next(keys), D, D)
    params["pooling_z2"] = _lin_params(next(keys), D, D)
    params["ffnn_z1"] = _lin_params(next(keys), D, label_size)
    params["ffnn_z2"] = _lin_params(next(keys), D, label_size)
    return params


# ----------------------------------------------------------------------------
# Full forward
# ----------------------------------------------------------------------------
def multichem_forward(params, batch_x, edge_index, batch_vec,
                      lin_x, lin_edge_index,
                      *, num_graphs, max_nodes, layer_size, heads, layer_depth):
    node_x = linear(batch_x, params["atom_init"]["w"], params["atom_init"]["b"])
    edge_x = linear(lin_x, params["bond_init"]["w"], params["bond_init"]["b"])

    # hoisted composed gather index (was node_x[edge_index[0]][lin_edge_index[0]] per layer)
    src_of_lin = edge_index[0][lin_edge_index[0]]

    for i in range(layer_depth):
        node_for_edge = node_x[src_of_lin]
        node_x = gnn_block(node_x, edge_index, edge_x, params["atom_blocks"][i])
        edge_x = gnn_block(edge_x, lin_edge_index, node_for_edge,
                           params["bond_blocks"][i])

    num_nodes = batch_x.shape[0]
    edge_x = edge_graph_pool(edge_x, edge_index, params["pooling_edge"], num_nodes)
    graph_z = merge(node_x, edge_x, params["merge1"])

    x, (b_idx, pos), att_mask = graph_to_seq(batch_vec, graph_z, num_graphs, max_nodes)
    pe = position_encoding(max_nodes, layer_size)
    seq_z = mha_attention(x, att_mask, pe, params["norm"], params["attention"], heads)
    seq_flat = seq_z[b_idx, pos]                       # == seq_z[masks]

    z_nodes = merge(graph_z, seq_flat, params["merge2"])
    z, z1, z2 = pooled_heads(
        [z_nodes, node_x, edge_x], batch_vec, num_graphs,
        [params["pooling_graph"], params["pooling_z1"], params["pooling_z2"]],
        [params["ffnn"], params["ffnn_z1"], params["ffnn_z2"]])
    return z, z1, z2


# ----------------------------------------------------------------------------
# Example
# ----------------------------------------------------------------------------
if __name__ == "__main__":
    node_size, edge_size = 16, 8
    layer_size, heads, label_size, layer_depth = 128, 4, 3, 3   # D=128 -> lane-dense

    # Two small molecular graphs: a 6-node chain and a 4-node chain.
    batch_np = np.array([0] * 6 + [1] * 4, np.int32)
    undirected = [(0, 1), (1, 2), (2, 3), (3, 4), (4, 5),
                  (6, 7), (7, 8), (8, 9)]
    edges = []
    for a, b in undirected:
        edges.append((a, b))
        edges.append((b, a))
    edge_index_np = np.array(edges, np.int32).T            # [2, E]
    E = edge_index_np.shape[1]

    # Line-graph edges: edge j -> edge k if dst(j) == src(k) and no backtrack.
    lin_edges = []
    for j, (sj, dj) in enumerate(edges):
        for k, (sk, dk) in enumerate(edges):
            if dj == sk and not (sj == dk and dj == sk):
                lin_edges.append((j, k))
    lin_edge_index_np = np.array(lin_edges, np.int32).T    # [2, E_lin]

    key = jax.random.PRNGKey(0)
    k_param, k_x, k_lin = jax.random.split(key, 3)
    params = init_params(k_param, node_size, edge_size, layer_size,
                         label_size, layer_depth, heads)

    batch_x = jax.random.normal(k_x, (batch_np.shape[0], node_size), jnp.float32)
    lin_x = jax.random.normal(k_lin, (E, node_size + edge_size), jnp.float32)

    batch_vec = jnp.asarray(batch_np)
    edge_index = jnp.asarray(edge_index_np)
    lin_edge_index = jnp.asarray(lin_edge_index_np)
    num_graphs = 2
    max_nodes = int(np.max(np.bincount(batch_np)))          # 6

    z, z1, z2 = multichem_forward(
        params, batch_x, edge_index, batch_vec, lin_x, lin_edge_index,
        num_graphs=num_graphs, max_nodes=max_nodes,
        layer_size=layer_size, heads=heads, layer_depth=layer_depth)

    jax.block_until_ready((z, z1, z2))
    assert z.shape == (num_graphs, label_size)
    assert z1.shape == (num_graphs, label_size)
    assert z2.shape == (num_graphs, label_size)
    assert np.all(np.isfinite(np.asarray(z)))
    assert np.all(np.isfinite(np.asarray(z1)))
    assert np.all(np.isfinite(np.asarray(z2)))
    print("KERNEL_OK")
</pallas_src>

<mosaic_0001>
module attributes {stable_mosaic.version = 11 : i64} {
  func.func @_linear_kernel(%arg0: i32, %arg1: memref<8x16xbf16, #tpu.memory_space<vmem>>, %arg2: memref<16x128xbf16, #tpu.memory_space<vmem>>, %arg3: memref<1x128xf32, #tpu.memory_space<vmem>>, %arg4: memref<8x128xbf16, #tpu.memory_space<vmem>>) attributes {dimension_semantics = [#tpu.dimension_semantics<parallel>], iteration_bounds = array<i64: 2>, scalar_prefetch = 0 : i64, scratch_operands = 0 : i64, tpu.core_type = #tpu.core_type<tc>, window_params = [{transform_indices = @transform_0, window_bounds = array<i64: 8, 16>}, {pipeline_mode = #tpu.pipeline_mode<synchronous>, transform_indices = @transform_1, window_bounds = array<i64: 16, 128>}, {pipeline_mode = #tpu.pipeline_mode<synchronous>, transform_indices = @transform_2, window_bounds = array<i64: 1, 128>}, {transform_indices = @transform_3, window_bounds = array<i64: 8, 128>}]} {
    %c0 = arith.constant 0 : index
    %c0_0 = arith.constant 0 : index
    %0 = vector.load %arg1[%c0, %c0_0] : memref<8x16xbf16, #tpu.memory_space<vmem>>, vector<8x16xbf16>
    %c0_1 = arith.constant 0 : index
    %c0_2 = arith.constant 0 : index
    %1 = vector.load %arg2[%c0_1, %c0_2] : memref<16x128xbf16, #tpu.memory_space<vmem>>, vector<16x128xbf16>
    %cst = arith.constant dense<0.000000e+00> : vector<8x128xf32>
    %2 = tpu.matmul %0, %1, %cst {dimension_numbers = #tpu.dot_dimension_numbers<[1], [0], [0], [1], [0, 0, 1, 1], [], []>} : vector<8x16xbf16>, vector<16x128xbf16>, vector<8x128xf32> -> vector<8x128xf32>
    %c0_3 = arith.constant 0 : index
    %c0_4 = arith.constant 0 : index
    %3 = vector.load %arg3[%c0_3, %c0_4] : memref<1x128xf32, #tpu.memory_space<vmem>>, vector<1x128xf32>
    %4 = vector.broadcast %3 : vector<1x128xf32> to vector<8x128xf32>
    %5 = arith.addf %2, %4 : vector<8x128xf32>
    %6 = arith.truncf %5 : vector<8x128xf32> to vector<8x128xbf16>
    %c0_5 = arith.constant 0 : index
    %c0_6 = arith.constant 0 : index
    %7 = vector.load %arg4[%c0_5, %c0_6] : memref<8x128xbf16, #tpu.memory_space<vmem>>, vector<8x128xbf16>
    tpu.vector_store %arg4[%c0_5, %c0_6], %6 {strides = array<i32>} : memref<8x128xbf16, #tpu.memory_space<vmem>>, vector<8x128xbf16>,
    return
  }
  func.func @transform_0(%arg0: i32) -> (i32, i32) {
    %c0_i32 = arith.constant 0 : i32
    %c0_i32_0 = arith.constant 0 : i32
    return %arg0, %c0_i32 : i32, i32
  }
  func.func @transform_1(%arg0: i32) -> (i32, i32) {
    %c0_i32 = arith.constant 0 : i32
    %c0_i32_0 = arith.constant 0 : i32
    %c0_i32_1 = arith.constant 0 : i32
    return %c0_i32, %c0_i32_0 : i32, i32
  }
  func.func @transform_2(%arg0: i32) -> (i32, i32) {
    %c0_i32 = arith.constant 0 : i32
    %c0_i32_0 = arith.constant 0 : i32
    %c0_i32_1 = arith.constant 0 : i32
    return %c0_i32, %c0_i32_0 : i32, i32
  }
  func.func @transform_3(%arg0: i32) -> (i32, i32) {
    %c0_i32 = arith.constant 0 : i32
    %c0_i32_0 = arith.constant 0 : i32
    return %arg0, %c0_i32 : i32, i32
  }
}

</mosaic_0001>

<llo_original>
// kernel: tpu_custom_call.1
$region0: #{tpu_custom_call.1}
  #allocation0 [shape = 'u32[]', space=smem, size = 0x4, offset = 0x4, fixed_abs, tag = 'smem constant byte address 0x4 - core index']
  #allocation1 [shape = 'u32[144,128]{1,0:T(1,128)}', space=vmem, size = 0x12000, scoped, tag = 'internal scratch']
  %s0 = inlined_call_operand.hbm [shape: bf16[10,16], index: 0, kind: input, shape index: {}]
  %s1 = inlined_call_operand.hbm [shape: bf16[16,128], index: 1, kind: input, shape index: {}]
  %s2 = inlined_call_operand.vmem [shape: f32[1,128], index: 2, kind: input, shape index: {}]
  %s3 = inlined_call_operand.hbm [shape: bf16[10,128], index: 3, kind: output, shape index: {}]
  %s4 = sld [smem:[#allocation0]]
  $region53: #{tpu_custom_call.1} parent=0
    _
  %s6 = ssub.s32 1, %s4
  %s7 = scalar_select 0, %s6, %s4
  $region1: #{tpu_custom_call.1} parent=0
    #allocation2 [shape = 'u8[4096]{0}', space=vmem, size = 0x1000, scoped, tag = 'input window, operand 0']
    #allocation3 [shape = 's32[2]{0}', space=sflag, size = 0x8, scoped, tag = 'scoped memory for tpu_custom_call.1']
    #allocation4 [shape = 's32[2]{0}', space=sflag, size = 0x8, scoped, tag = 'scoped memory for tpu_custom_call.1']
    #allocation5 [shape = 'u8[4096]{0}', space=vmem, size = 0x1000, scoped, tag = 'input window, operand 1, single buffered']
    #allocation6 [shape = 's32[1]{0}', space=sflag, size = 0x4, scoped, tag = 'scoped memory for tpu_custom_call.1']
    #allocation7 [shape = 'u8[4096]{0}', space=vmem, size = 0x1000, scoped, tag = 'output window, operand 0']
    %8 = vsyncpa [#allocation3], 0
    %s9 = scalar_lea.sflag [#allocation3], 1
    %10 = vsyncpa %s9, 0
    %11 = vsyncpa [#allocation6], 0
    %12 = vsyncpa [#allocation4], 0
    %s13 = scalar_lea.sflag [#allocation4], 1
    %14 = vsyncpa %s13, 0
    loop: start=0, step=1, limit=4
    $region2: #{tpu_custom_call.1} parent=1 // loop_pre_header
      _
    $region3: #{tpu_custom_call.1} parent=1 // loop_header
      %s16 = sphi 0, %s20
      %p17 = scmp.ge.s32.totalorder %s16, 4
      %s26 = sphi 0, %s28
      %s29 = sphi 0, %s26
      %s30 = sphi 0, %s29
      %s46 = sphi 0, %s30
      %s50 = sphi 0, %s50
      %s52 = sphi 0, %s50
      %s53 = sphi 0, %s52
      %s67 = sphi 0, %s53
      %s71 = sphi 0, %s71
      %s73 = sphi 0, %s71
      %s74 = sphi 0, %s73
      %s88 = sphi 0, %s74
      %s94 = sphi 0, %s96
      %s97 = sphi 0, %s94
      %s98 = sphi 0, %s97
      %s114 = sphi 0, %s98
    $region4: #{tpu_custom_call.1} parent=1 // loop_header_branch
      %19 = sbr.rel (%p17) target = $region8
    $region5: #{tpu_custom_call.1} parent=1 // loop_body
      %s21 = ssub.s32 %s16, 1
      %s22 = ssub.s32 %s16, 2
      %s23 = sadd.s32 %s16, 1
      %s24 = ssub.s32 %s16, %s23
      %p25 = scmp.eq.s32.totalorder %s24, 0
      %s27 = sadd.s32 %s26, 1
      %s28 = scalar_select %p25, %s26, %s27
      %p31 = pneg %p25
      %p32 = scmp.eq.s32.totalorder %s16, 1
      %p33 = por %p31, %p32
      %p34 = scmp.ne.s32.totalorder %s26, %s29
      %p35 = scmp.eq.s32.totalorder %s16, 0
      %p36 = por %p34, %p35
      %p37 = scmp.ne.s32.totalorder %s26, %s29
      %p38 = scmp.eq.s32.totalorder %s21, 1
      %p39 = por %p37, %p38
      %p40 = scmp.ne.s32.totalorder %s29, %s30
      %p41 = scmp.eq.s32.totalorder %s21, 0
      %p42 = por %p40, %p41
      %p43 = scmp.ne.s32.totalorder %s29, %s30
      %p44 = scmp.eq.s32.totalorder %s22, 1
      %p45 = por %p43, %p44
      %p47 = scmp.ne.s32.totalorder %s30, %s46
      %p48 = scmp.eq.s32.totalorder %s22, 0
      %p49 = por %p47, %p48
      %s51 = sadd.s32 %s50, 1
      %p54 = scmp.eq.s32.totalorder %s16, 1
      %p55 = scmp.ne.s32.totalorder %s50, %s52
      %p56 = scmp.eq.s32.totalorder %s16, 0
      %p57 = por %p55, %p56
      %p58 = scmp.ne.s32.totalorder %s50, %s52
      %p59 = scmp.eq.s32.totalorder %s21, 1
      %p60 = por %p58, %p59
      %p61 = scmp.ne.s32.totalorder %s52, %s53
      %p62 = scmp.eq.s32.totalorder %s21, 0
      %p63 = por %p61, %p62
      %p64 = scmp.ne.s32.totalorder %s52, %s53
      %p65 = scmp.eq.s32.totalorder %s22, 1
      %p66 = por %p64, %p65
      %p68 = scmp.ne.s32.totalorder %s53, %s67
      %p69 = scmp.eq.s32.totalorder %s22, 0
      %p70 = por %p68, %p69
      %s72 = sadd.s32 %s71, 1
      %p75 = scmp.eq.s32.totalorder %s16, 1
      %p76 = scmp.ne.s32.totalorder %s71, %s73
      %p77 = scmp.eq.s32.totalorder %s16, 0
      %p78 = por %p76, %p77
      %p79 = scmp.ne.s32.totalorder %s71, %s73
      %p80 = scmp.eq.s32.totalorder %s21, 1
      %p81 = por %p79, %p80
      %p82 = scmp.ne.s32.totalorder %s73, %s74
      %p83 = scmp.eq.s32.totalorder %s21, 0
      %p84 = por %p82, %p83
      %p85 = scmp.ne.s32.totalorder %s73, %s74
      %p86 = scmp.eq.s32.totalorder %s22, 1
      %p87 = por %p85, %p86
      %p89 = scmp.ne.s32.totalorder %s74, %s88
      %p90 = scmp.eq.s32.totalorder %s22, 0
      %p91 = por %p89, %p90
      %s92 = ssub.s32 %s16, %s23
      %p93 = scmp.eq.s32.totalorder %s92, 0
      %s95 = sadd.s32 %s94, 1
      %s96 = scalar_select %p93, %s94, %s95
      %p99 = pneg %p93
      %p100 = scmp.eq.s32.totalorder %s16, 1
      %p101 = por %p99, %p100
      %p102 = scmp.ne.s32.totalorder %s94, %s97
      %p103 = scmp.eq.s32.totalorder %s16, 0
      %p104 = por %p102, %p103
      %p105 = scmp.ne.s32.totalorder %s94, %s97
      %p106 = scmp.eq.s32.totalorder %s21, 1
      %p107 = por %p105, %p106
      %p108 = scmp.ne.s32.totalorder %s97, %s98
      %p109 = scmp.eq.s32.totalorder %s21, 0
      %p110 = por %p108, %p109
      %p111 = scmp.ne.s32.totalorder %s97, %s98
      %p112 = scmp.eq.s32.totalorder %s22, 1
      %p113 = por %p111, %p112
      %p115 = scmp.ne.s32.totalorder %s98, %s114
      %p116 = scmp.eq.s32.totalorder %s22, 0
      %p117 = por %p115, %p116
      %p118 = scmp.le.s32.totalorder 1, %s16
      %p119 = scmp.lt.s32.totalorder %s16, 3
      %p120 = pnand %p118, %p119
      %p121 = pneg %p120
      // Predicated region
      $region9: #{tpu_custom_call.1} parent=5 // pred_check
        _
      $region10: #{tpu_custom_call.1} parent=5 // pred_check_branch
        %123 = sbr.rel (%p120) target = $region12
      $region11: #{tpu_custom_call.1} parent=5 // pred_region
        %s124 = ssub.s32 %s16, 1
        // Predicated region
        $region13: #{tpu_custom_call.1} parent=11 // pred_check
          %p125 = pneg %p63
        $region14: #{tpu_custom_call.1} parent=11 // pred_check_branch
          %127 = sbr.rel (%p125) target = $region16
        $region15: #{tpu_custom_call.1} parent=11 // pred_region
          %s129 = ssub.s32 128, 128
          %130 = vsyncadd [#allocation6], %s129
          %s131 = sshll.u32 [#allocation5], 4
          %s132 = int_to_ptr.vmem [resolvable:$true] %s131
          %137 = dma.hbm_to_vmem [thread:$0]  %s1, 128, %s132, [#allocation6], 64, 64, 4
        $region16: #{tpu_custom_call.1} parent=11 // pred_fallthru
          _
        // Predicated region
        $region17: #{tpu_custom_call.1} parent=11 // pred_check
          %p138 = pneg %p84
        $region18: #{tpu_custom_call.1} parent=11 // pred_check_branch
          %140 = sbr.rel (%p138) target = $region20
        $region19: #{tpu_custom_call.1} parent=11 // pred_region
          _
        $region20: #{tpu_custom_call.1} parent=11 // pred_fallthru
          _
      $region12: #{tpu_custom_call.1} parent=5 // pred_fallthru
        _
      %p141 = scmp.lt.s32.totalorder %s16, 2
      // Predicated region
      $region21: #{tpu_custom_call.1} parent=5 // pred_check
        %p142 = pneg %p141
      $region22: #{tpu_custom_call.1} parent=5 // pred_check_branch
        %144 = sbr.rel (%p142) target = $region24
      $region23: #{tpu_custom_call.1} parent=5 // pred_region
        // Predicated region
        $region25: #{tpu_custom_call.1} parent=23 // pred_check
          %p145 = pneg %p36
        $region26: #{tpu_custom_call.1} parent=23 // pred_check_branch
          %147 = sbr.rel (%p145) target = $region28
        $region27: #{tpu_custom_call.1} parent=23 // pred_region
          %s148 = sand.u32 %s26, 1
          %s149 = scalar_lea.sflag [#allocation3], %s148
          %s150 = sand.u32 %s26, 1
          %s151 = smul.addr %s150, 4
          %s152 = scalar_lea.vmem [#allocation2], %s151
          %s154 = ssub.s32 64, 64
          %155 = vsyncadd %s149, %s154
          %s156 = smul.addr %s16, 64
          %s157 = scalar_lea.hbm %s0, %s156
          %s159 = sshll.u32 %s152, 4
          %s160 = int_to_ptr.vmem [resolvable:$true] %s159
          %162 = dma.hbm_to_vmem [thread:$0]  %s157, 64, %s160, %s149
        $region28: #{tpu_custom_call.1} parent=23 // pred_fallthru
          _
      $region24: #{tpu_custom_call.1} parent=5 // pred_fallthru
        _
      %p163 = scmp.le.s32.totalorder 1, %s16
      %p164 = scmp.lt.s32.totalorder %s16, 3
      %p165 = pnand %p163, %p164
      %p166 = pneg %p165
      // Predicated region
      $region29: #{tpu_custom_call.1} parent=5 // pred_check
        _
      $region30: #{tpu_custom_call.1} parent=5 // pred_check_branch
        %168 = sbr.rel (%p165) target = $region32
      $region31: #{tpu_custom_call.1} parent=5 // pred_region
        %s169 = ssub.s32 %s16, 1
        %s170 = sand.u32 %s29, 1
        %s171 = scalar_lea.sflag [#allocation3], %s170
        %s172 = sand.u32 %s29, 1
        %s173 = smul.addr %s172, 4
        %s174 = scalar_lea.vmem [#allocation2], %s173
        // Predicated region
        $region33: #{tpu_custom_call.1} parent=31 // pred_check
          %p175 = pneg %p42
        $region34: #{tpu_custom_call.1} parent=31 // pred_check_branch
          %177 = sbr.rel (%p175) target = $region36
        $region35: #{tpu_custom_call.1} parent=31 // pred_region
          %178 = dma.done %s171, 64
        $region36: #{tpu_custom_call.1} parent=31 // pred_fallthru
          _
        // Predicated region
        $region37: #{tpu_custom_call.1} parent=31 // pred_check
          %p179 = pneg %p63
        $region38: #{tpu_custom_call.1} parent=31 // pred_check_branch
          %181 = sbr.rel (%p179) target = $region40
        $region39: #{tpu_custom_call.1} parent=31 // pred_region
          %182 = dma.done [#allocation6], 128
        $region40: #{tpu_custom_call.1} parent=31 // pred_fallthru
          _
        %s183 = sand.u32 %s29, 1
        %s184 = scalar_lea.sflag [#allocation3], %s183
        %s185 = sand.u32 %s29, 1
        %s186 = smul.addr %s185, 4
        %s187 = scalar_lea.vmem [#allocation2], %s186
        %p188 = pneg %p42
        %p189 = pneg %p39
        %p190 = pneg %p63
        %p191 = pneg %p60
        %p192 = pneg %p84
        %p193 = pneg %p81
        %p194 = pneg %p110
        %p195 = pneg %p107
        %s196 = sand.u32 %s97, 1
        %s197 = scalar_lea.sflag [#allocation4], %s196
        %s198 = sand.u32 %s97, 1
        %s199 = smul.addr %s198, 4
        %s200 = scalar_lea.vmem [#allocation7], %s199
        %v202 = vld [vmem:[%s174] sm:$0xf]
        %v203 = vld [vmem:[#allocation5] sm:$0xf]
        %v204 = vld [vmem:[#allocation5 + $0x4] sm:$0xf]
        %v205 = vld [vmem:[%s2] sm:$0x1]
        %v207 = vlaneseq
        %v208 = vshrl.u32 %v207, 7
        %v209 = vsub.s32 0, %v208
        %v210 = vrot.slane %v205, %v209
        %v214 = vunpack.c.l.b16 %v203
        %v215 = vunpack.c.l.b16 %v204
        %v216 = vpack.c.b16 %v215, %v214
        %vm218 = vcmask 130048
        %v220 = vsel %vm218, %v202, 0
        %222 = vmatprep.subr.bf16.mxu0 0
        %223 = vmatpush1.bf16.msra.mxu0 %v216
        %224 = vmatprep.subr.bf16.mxu0 0
        %225 = vmatpush1.bf16.msra.mxu0 0
        %226 = vmatprep.subr.bf16.mxu0 0
        %227 = vmatpush1.bf16.msra.mxu0 0
        %228 = vmatprep.subr.bf16.mxu0 0
        %229 = vmatpush1.bf16.msra.mxu0 0
        %230 = vmatprep.subr.bf16.mxu0 0
        %231 = vmatpush1.bf16.msra.mxu0 0
        %232 = vmatprep.subr.bf16.mxu0 0
        %233 = vmatpush1.bf16.msra.mxu0 0
        %234 = vmatprep.subr.bf16.mxu0 0
        %235 = vmatpush1.bf16.msra.mxu0 0
        %236 = vmatprep.subr.bf16.mxu0 0
        %237 = vmatpush1.bf16.msra.mxu0 0
        %238 = vmatprep.subr.bf16.mxu0 0
        %239 = vmatpush1.bf16.msra.mxu0 0
        %240 = vmatprep.subr.bf16.mxu0 0
        %241 = vmatpush1.bf16.msra.mxu0 0
        %242 = vmatprep.subr.bf16.mxu0 0
        %243 = vmatpush1.bf16.msra.mxu0 0
        %244 = vmatprep.subr.bf16.mxu0 0
        %245 = vmatpush1.bf16.msra.mxu0 0
        %246 = vmatprep.subr.bf16.mxu0 0
        %247 = vmatpush1.bf16.msra.mxu0 0
        %248 = vmatprep.subr.bf16.mxu0 0
        %249 = vmatpush1.bf16.msra.mxu0 0
        %250 = vmatprep.subr.bf16.mxu0 0
        %251 = vmatpush1.bf16.msra.mxu0 0
        %252 = vmatprep.subr.bf16.mxu0 0
        %253 = vmatpush1.bf16.msra.mxu0 0
        %254 = vmatprep.mubr.bf16.mxu0 0
        %255 = vmatmul.mubr.bf16.gmra.mrb[0].mxu0 %v220
        %v256 = vpop.f32.mrb[0].mxu0
        %v257 = vadd.f32 %v210, %v256
        %v258 = vpop.f32.mrb[0].mxu0
        %v259 = vpop.f32.mrb[0].mxu0
        %v260 = vpop.f32.mrb[0].mxu0
        %261 = vdwg.mxu0
        %v262 = vpack.c.bf16 %v257, %v257
        %263 = vst [vmem:[%s200] sm:$0xf] %v262
        %s264 = sand.u32 %s97, 1
        %s265 = scalar_lea.sflag [#allocation4], %s264
        %s266 = sand.u32 %s97, 1
        %s267 = smul.addr %s266, 4
        %s268 = scalar_lea.vmem [#allocation7], %s267
        // Predicated region
        $region41: #{tpu_custom_call.1} parent=31 // pred_check
          %p269 = pneg %p107
        $region42: #{tpu_custom_call.1} parent=31 // pred_check_branch
          %271 = sbr.rel (%p269) target = $region44
        $region43: #{tpu_custom_call.1} parent=31 // pred_region
          %s273 = ssub.s32 64, 64
          %274 = vsyncadd %s265, %s273
          %s275 = smul.addr %s21, 64
          %s276 = scalar_lea.hbm %s3, %s275
          %s278 = sshll.u32 %s268, 4
          %s279 = int_to_ptr.vmem [resolvable:$true] %s278
          %281 = dma.vmem_to_hbm [thread:$0]  %s279, 64, %s276, %s265
        $region44: #{tpu_custom_call.1} parent=31 // pred_fallthru
          _
      $region32: #{tpu_custom_call.1} parent=5 // pred_fallthru
        _
      %p282 = scmp.le.s32.totalorder 2, %s16
      // Predicated region
      $region45: #{tpu_custom_call.1} parent=5 // pred_check
        %p283 = pneg %p282
      $region46: #{tpu_custom_call.1} parent=5 // pred_check_branch
        %285 = sbr.rel (%p283) target = $region48
      $region47: #{tpu_custom_call.1} parent=5 // pred_region
        %s286 = ssub.s32 %s16, 2
        // Predicated region
        $region49: #{tpu_custom_call.1} parent=47 // pred_check
          %p287 = pneg %p113
        $region50: #{tpu_custom_call.1} parent=47 // pred_check_branch
          %289 = sbr.rel (%p287) target = $region52
        $region51: #{tpu_custom_call.1} parent=47 // pred_region
          %s290 = sand.u32 %s98, 1
          %s291 = scalar_lea.sflag [#allocation4], %s290
          %s292 = sand.u32 %s98, 1
          %s293 = smul.addr %s292, 4
          %s294 = scalar_lea.vmem [#allocation7], %s293
          %295 = dma.done %s291, 64
        $region52: #{tpu_custom_call.1} parent=47 // pred_fallthru
          _
      $region48: #{tpu_custom_call.1} parent=5 // pred_fallthru
        _
    $region6: #{tpu_custom_call.1} parent=1 // loop_footer
      %s20 = sadd.s32 1, %s16
    $region7: #{tpu_custom_call.1} parent=1 // loop_footer_branch
      %15 = sbr.rel target = $region3
    $region8: #{tpu_custom_call.1} parent=1 // loop_exit
      _
    %296 = vsyncpa [#allocation3], 1
    %s297 = scalar_lea.sflag [#allocation3], 1
    %298 = vsyncpa %s297, 1
    %299 = vsyncpa [#allocation6], 1
    %300 = vsyncpa [#allocation4], 1
    %s301 = scalar_lea.sflag [#allocation4], 1
    %302 = vsyncpa %s301, 1

</llo_original>
